<compile_context>
chip_gen: v7x
topology: tpu7x:2x2x1
jax: 0.10.0
libtpu: 0.0.40
codegen_flags: <defaults>
</compile_context>

<pallas_src>
import jax
import jax.numpy as jnp
from jax import lax
from jax.experimental import pallas as pl
from jax.experimental.pallas import tpu as pltpu

LEAKY_SLOPE = 0.01  # F.leaky_relu default negative_slope


def _leaky_relu(x):
    return jnp.where(x > 0, x, LEAKY_SLOPE * x)


def _round_up(x, m):
    return ((x + m - 1) // m) * m


# ---------------------------------------------------------------------------
# Fused edge-update kernel (one edge tile per grid step):
#   out = leaky_relu( twohot(src, dst) @ P  +  e (.) We )
# where P = [atom@(W1_src+W2)+bias ; atom@(W1_dst+W2)] is a small, VMEM-
# resident, grid-invariant node-projection table.
# ---------------------------------------------------------------------------
def edge_update_kernel(idx_ref, e_ref, proj_ref, we_ref, o_ref):
    tile_e = idx_ref.shape[0]
    two_n = proj_ref.shape[0]
    n_off = two_n // 2

    idx = idx_ref[...]                       # (tile_e, 2) int32: [src, dst]
    src = idx[:, 0:1]                        # (tile_e, 1)
    dst = idx[:, 1:2] + n_off                # (tile_e, 1), offset into 2nd half

    # Two-hot selection matrix: exactly one 1 in [0, n_off) (src row of P_src)
    # and one 1 in [n_off, 2*n_off) (dst row of P_dst). MXU does the gather+sum.
    lane = lax.broadcasted_iota(jnp.int32, (tile_e, two_n), 1)
    sel = jnp.logical_or(lane == src, lane == dst)
    acc = jnp.dot(sel.astype(proj_ref.dtype), proj_ref[...],
                  preferred_element_type=jnp.float32)   # (tile_e, out_pad) f32

    ef = e_ref[...].astype(jnp.float32)
    if e_ref.shape[1] == 1:
        # 1-wide bond feature in this module -> VPU broadcast multiply.
        acc = acc + ef * we_ref[...]
    else:
        acc = acc + jnp.dot(ef, we_ref[...],
                            preferred_element_type=jnp.float32)

    o_ref[...] = _leaky_relu(acc).astype(o_ref.dtype)


# ---------------------------------------------------------------------------
# Wrapper
# ---------------------------------------------------------------------------
def dti_conv_graph3_test(src, dst, atom_feats, bond_feats, params, *,
                         tile_e=2048):
    n_nodes, node_dim = atom_feats.shape
    n_edges, bond_dim = bond_feats.shape
    out_dim = params["w1"].shape[1]

    # --- fold concat + W2 into split first-layer weights (tiny, one-time) ---
    w1 = params["w1"].astype(jnp.float32)   # (2*node_dim+bond_dim, out) == W1.weight.T
    w2 = params["w2"].astype(jnp.float32)   # (node_dim, out)            == W2.weight.T
    wa = w1[:node_dim] + w2                 # applied to h[src]
    wb = w1[node_dim:2 * node_dim] + w2     # applied to h[dst]
    we = w1[2 * node_dim:]                  # applied to bond feats
    bias = (params["b1"] + params["b2"]).reshape(1, out_dim).astype(jnp.float32)

    # --- lane-dense output: pad out_dim to a multiple of 128, slice after ---
    out_pad = _round_up(out_dim, 128)

    # --- hoist node-side matmuls onto the (small) node table, fold bias ---
    atom_f32 = atom_feats.astype(jnp.float32)
    p_src = atom_f32 @ wa + bias            # (N, out_dim)
    p_dst = atom_f32 @ wb                   # (N, out_dim)
    n_pad = _round_up(max(n_nodes, 1), 64)  # dst offset; keeps K MXU-friendly
    two_n = 2 * n_pad
    proj = jnp.zeros((two_n, out_pad), jnp.float32)
    proj = proj.at[:n_nodes, :out_dim].set(p_src)
    proj = proj.at[n_pad:n_pad + n_nodes, :out_dim].set(p_dst)
    proj = proj.astype(jnp.bfloat16)        # bf16 VMEM-resident table

    we_p = jnp.zeros((bond_dim, out_pad), jnp.float32).at[:, :out_dim].set(we)

    # --- per-edge streams (bf16 / int32) ---
    idx = jnp.stack([src, dst], axis=1).astype(jnp.int32)   # (E, 2)
    ef = bond_feats.astype(jnp.bfloat16)                     # (E, bond_dim)

    # --- edge tile selection ---
    tile_e = int(tile_e)
    tile_e = max(16, min(tile_e, _round_up(n_edges, 16)))
    # keep >= 2 grid tiles so both v7x TensorCores get work
    if n_edges > 16:
        tile_e = min(tile_e, _round_up(pl.cdiv(n_edges, 2), 16))
    # bound the in-kernel two-hot selection matrix to ~4 MiB of bf16
    sel_cap_rows = (4 * 1024 * 1024) // (2 * two_n)
    tile_e = min(tile_e, max(16, (sel_cap_rows // 16) * 16))
    tile_e = _round_up(tile_e, 16)
    grid = (pl.cdiv(n_edges, tile_e),)

    # --- advisory cost + explicit VMEM budget (v7x: 64 MiB physical) ---
    flops = 2 * n_edges * two_n * out_pad + 4 * n_edges * out_pad
    bytes_accessed = int(idx.size * 4 + ef.size * 2 + proj.size * 2
                         + we_p.size * 4 + n_edges * out_pad * 2)
    cost = pl.CostEstimate(flops=flops, transcendentals=0,
                           bytes_accessed=bytes_accessed)
    vmem_bytes = (2 * tile_e * (2 * 4 + bond_dim * 2 + out_pad * 2)  # dbl-buf tiles
                  + 2 * (proj.size * 2 + we_p.size * 4)              # invariant blocks
                  + tile_e * two_n * 2 + tile_e * out_pad * 4        # sel + f32 acc
                  + (4 << 20))                                       # headroom
    vmem_limit = int(min(max(vmem_bytes, 32 << 20), 48 << 20))

    out = pl.pallas_call(
        edge_update_kernel,
        out_shape=jax.ShapeDtypeStruct((n_edges, out_pad), jnp.bfloat16),
        grid_spec=pltpu.PrefetchScalarGridSpec(
            num_scalar_prefetch=0,
            grid=grid,
            in_specs=[
                pl.BlockSpec((tile_e, 2), lambda i: (i, 0)),           # (src,dst)
                pl.BlockSpec((tile_e, bond_dim), lambda i: (i, 0)),    # bond feats
                pl.BlockSpec((two_n, out_pad), lambda i: (0, 0)),      # node proj
                pl.BlockSpec((bond_dim, out_pad), lambda i: (0, 0)),   # We
            ],
            out_specs=pl.BlockSpec((tile_e, out_pad), lambda i: (i, 0)),
        ),
        compiler_params=pltpu.CompilerParams(
            dimension_semantics=("parallel",),
            vmem_limit_bytes=vmem_limit),
        cost_estimate=cost,
    )(idx, ef, proj, we_p)

    return out[:, :out_dim]     # bf16 (E, out_dim); no-op slice when out_dim%128==0


# ---------------------------------------------------------------------------
# Deterministic PyTorch-style Linear init and pure-JAX reference
# ---------------------------------------------------------------------------
def init_params(key, in_dim, out_dim):
    node_dim = in_dim - 1
    w1_in = 2 * node_dim + 1                          # (in_dim - 1) * 2 + 1
    ks = jax.random.split(key, 4)

    def linear(kw, kb, fan_in, fan_out):
        bound = 1.0 / jnp.sqrt(float(fan_in))
        w = jax.random.uniform(kw, (fan_in, fan_out), jnp.float32, -bound, bound)
        b = jax.random.uniform(kb, (1, fan_out), jnp.float32, -bound, bound)
        return w, b

    w1, b1 = linear(ks[0], ks[1], w1_in, out_dim)
    w2, b2 = linear(ks[2], ks[3], node_dim, out_dim)
    return dict(w1=w1, b1=b1, w2=w2, b2=b2)


def reference_forward(src, dst, atom_feats, bond_feats, p):
    hs = atom_feats[src]
    hd = atom_feats[dst]
    init = jnp.concatenate([hs, hd, bond_feats], axis=1)   # EdgeInit
    m = hs + hd                                             # u_add_v
    y = init @ p["w1"] + p["b1"] + m @ p["w2"] + p["b2"]    # W1(init) + W2(m)
    return _leaky_relu(y)


if __name__ == "__main__":
    key = jax.random.PRNGKey(0)
    k_nodes, k_bonds, k_src, k_dst, k_params = jax.random.split(key, 5)

    NODE_DIM = 32                 # == in_dim - 1
    IN_DIM = NODE_DIM + 1         # module's `in_dim`
    OUT_DIM = 128                 # lane-dense output width
    N_NODES = 24
    N_EDGES = 200                 # not a multiple of the tile -> masked tail tile

    atom_feats = jax.random.normal(k_nodes, (N_NODES, NODE_DIM), jnp.float32)
    bond_feats = jax.random.normal(k_bonds, (N_EDGES, 1), jnp.float32)
    src = jax.random.randint(k_src, (N_EDGES,), 0, N_NODES)
    dst = jax.random.randint(k_dst, (N_EDGES,), 0, N_NODES)

    params = init_params(k_params, IN_DIM, OUT_DIM)

    out = dti_conv_graph3_test(src, dst, atom_feats, bond_feats, params)
    out = jax.block_until_ready(out)

    ref = reference_forward(src, dst, atom_feats, bond_feats, params)
    assert out.shape == (N_EDGES, OUT_DIM)
    assert out.dtype == jnp.bfloat16
    assert jnp.allclose(out.astype(jnp.float32), ref, rtol=2e-2, atol=2e-2), \
        "mismatch vs JAX reference"

    print("KERNEL_OK")
</pallas_src>

<mosaic_0001>
module attributes {stable_mosaic.version = 11 : i64} {
  func.func @edge_update_kernel(%arg0: i32, %arg1: memref<112x2xi32, #tpu.memory_space<vmem>>, %arg2: memref<112x1xbf16, #tpu.memory_space<vmem>>, %arg3: memref<128x128xbf16, #tpu.memory_space<vmem>>, %arg4: memref<1x128xf32, #tpu.memory_space<vmem>>, %arg5: memref<112x128xbf16, #tpu.memory_space<vmem>>) attributes {dimension_semantics = [#tpu.dimension_semantics<parallel>], iteration_bounds = array<i64: 2>, scalar_prefetch = 0 : i64, scratch_operands = 0 : i64, tpu.core_type = #tpu.core_type<tc>, window_params = [{transform_indices = @transform_0, window_bounds = array<i64: 112, 2>}, {transform_indices = @transform_1, window_bounds = array<i64: 112, 1>}, {pipeline_mode = #tpu.pipeline_mode<synchronous>, transform_indices = @transform_2, window_bounds = array<i64: 128, 128>}, {pipeline_mode = #tpu.pipeline_mode<synchronous>, transform_indices = @transform_3, window_bounds = array<i64: 1, 128>}, {transform_indices = @transform_4, window_bounds = array<i64: 112, 128>}]} {
    %c0 = arith.constant 0 : index
    %c0_0 = arith.constant 0 : index
    %0 = vector.load %arg1[%c0, %c0_0] : memref<112x2xi32, #tpu.memory_space<vmem>>, vector<112x2xi32>
    %1 = vector.extract_strided_slice %0 {offsets = [0, 0], sizes = [112, 1], strides = [1, 1]} : vector<112x2xi32> to vector<112x1xi32>
    %2 = vector.extract_strided_slice %0 {offsets = [0, 1], sizes = [112, 1], strides = [1, 1]} : vector<112x2xi32> to vector<112x1xi32>
    %c64_i32 = arith.constant 64 : i32
    %3 = vector.broadcast %c64_i32 : i32 to vector<112x1xi32>
    %4 = arith.addi %2, %3 : vector<112x1xi32>
    %5 = tpu.iota {dimensions = array<i32: 1>} : vector<112x128xi32>
    %6 = vector.broadcast %1 : vector<112x1xi32> to vector<112x128xi32>
    %7 = arith.cmpi eq, %5, %6 : vector<112x128xi32>
    %8 = vector.broadcast %4 : vector<112x1xi32> to vector<112x128xi32>
    %9 = arith.cmpi eq, %5, %8 : vector<112x128xi32>
    %10 = arith.ori %7, %9 : vector<112x128xi1>
    %11 = arith.extui %10 : vector<112x128xi1> to vector<112x128xi32>
    %12 = arith.sitofp %11 : vector<112x128xi32> to vector<112x128xf32>
    %13 = arith.truncf %12 : vector<112x128xf32> to vector<112x128xbf16>
    %c0_1 = arith.constant 0 : index
    %c0_2 = arith.constant 0 : index
    %14 = vector.load %arg3[%c0_1, %c0_2] : memref<128x128xbf16, #tpu.memory_space<vmem>>, vector<128x128xbf16>
    %cst = arith.constant dense<0.000000e+00> : vector<112x128xf32>
    %15 = tpu.matmul %13, %14, %cst {dimension_numbers = #tpu.dot_dimension_numbers<[1], [0], [0], [1], [0, 0, 1, 1], [], []>} : vector<112x128xbf16>, vector<128x128xbf16>, vector<112x128xf32> -> vector<112x128xf32>
    %c0_3 = arith.constant 0 : index
    %c0_4 = arith.constant 0 : index
    %16 = vector.load %arg2[%c0_3, %c0_4] : memref<112x1xbf16, #tpu.memory_space<vmem>>, vector<112x1xbf16>
    %17 = arith.extf %16 : vector<112x1xbf16> to vector<112x1xf32>
    %c0_5 = arith.constant 0 : index
    %c0_6 = arith.constant 0 : index
    %18 = vector.load %arg4[%c0_5, %c0_6] : memref<1x128xf32, #tpu.memory_space<vmem>>, vector<1x128xf32>
    %19 = vector.broadcast %17 : vector<112x1xf32> to vector<112x128xf32>
    %20 = vector.broadcast %18 : vector<1x128xf32> to vector<112x128xf32>
    %21 = arith.mulf %19, %20 : vector<112x128xf32>
    %22 = arith.addf %15, %21 : vector<112x128xf32>
    %cst_7 = arith.constant 0.000000e+00 : f32
    %23 = vector.broadcast %cst_7 : f32 to vector<112x128xf32>
    %24 = arith.cmpf ogt, %22, %23 : vector<112x128xf32>
    %cst_8 = arith.constant 0.00999999977 : f32
    %25 = vector.broadcast %cst_8 : f32 to vector<112x128xf32>
    %26 = arith.mulf %25, %22 : vector<112x128xf32>
    %27 = arith.select %24, %22, %26 : vector<112x128xi1>, vector<112x128xf32>
    %28 = arith.truncf %27 : vector<112x128xf32> to vector<112x128xbf16>
    %c0_9 = arith.constant 0 : index
    %c0_10 = arith.constant 0 : index
    %29 = vector.load %arg5[%c0_9, %c0_10] : memref<112x128xbf16, #tpu.memory_space<vmem>>, vector<112x128xbf16>
    tpu.vector_store %arg5[%c0_9, %c0_10], %28 {strides = array<i32>} : memref<112x128xbf16, #tpu.memory_space<vmem>>, vector<112x128xbf16>,
    return
  }
  func.func @transform_0(%arg0: i32) -> (i32, i32) {
    %c0_i32 = arith.constant 0 : i32
    %c0_i32_0 = arith.constant 0 : i32
    return %arg0, %c0_i32 : i32, i32
  }
  func.func @transform_1(%arg0: i32) -> (i32, i32) {
    %c0_i32 = arith.constant 0 : i32
    %c0_i32_0 = arith.constant 0 : i32
    return %arg0, %c0_i32 : i32, i32
  }
  func.func @transform_2(%arg0: i32) -> (i32, i32) {
    %c0_i32 = arith.constant 0 : i32
    %c0_i32_0 = arith.constant 0 : i32
    %c0_i32_1 = arith.constant 0 : i32
    return %c0_i32, %c0_i32_0 : i32, i32
  }
  func.func @transform_3(%arg0: i32) -> (i32, i32) {
    %c0_i32 = arith.constant 0 : i32
    %c0_i32_0 = arith.constant 0 : i32
    %c0_i32_1 = arith.constant 0 : i32
    return %c0_i32, %c0_i32_0 : i32, i32
  }
  func.func @transform_4(%arg0: i32) -> (i32, i32) {
    %c0_i32 = arith.constant 0 : i32
    %c0_i32_0 = arith.constant 0 : i32
    return %arg0, %c0_i32 : i32, i32
  }
}

</mosaic_0001>

<llo_original>
// kernel: tpu_custom_call.1
$region0: #{tpu_custom_call.1}
  #allocation0 [shape = 'u32[]', space=smem, size = 0x4, offset = 0x4, fixed_abs, tag = 'smem constant byte address 0x4 - core index']
  #allocation1 [shape = 'u32[144,128]{1,0:T(1,128)}', space=vmem, size = 0x12000, scoped, tag = 'internal scratch']
  %s0 = inlined_call_operand.vmem [shape: s32[200,2], index: 0, kind: input, shape index: {}]
  %s1 = inlined_call_operand.vmem [shape: bf16[200,1], index: 1, kind: input, shape index: {}]
  %s2 = inlined_call_operand.vmem [shape: bf16[128,128], index: 2, kind: input, shape index: {}]
  %s3 = inlined_call_operand.vmem [shape: f32[1,128], index: 3, kind: input, shape index: {}]
  %s4 = inlined_call_operand.hbm [shape: bf16[200,128], index: 4, kind: output, shape index: {}]
  %s5 = sld [smem:[#allocation0]]
  $region49: #{tpu_custom_call.1} parent=0
    _
  %s7 = ssub.s32 1, %s5
  %s8 = scalar_select 0, %s7, %s5
  $region1: #{tpu_custom_call.1} parent=0
    #allocation2 [shape = 'u8[57344]{0}', space=vmem, size = 0xe000, scoped, tag = 'output window, operand 0']
    #allocation3 [shape = 's32[2]{0}', space=sflag, size = 0x8, scoped, tag = 'scoped memory for tpu_custom_call.1']
    %9 = vsyncpa [#allocation3], 0
    %s10 = scalar_lea.sflag [#allocation3], 1
    %11 = vsyncpa %s10, 0
    loop: start=0, step=1, limit=4
    $region2: #{tpu_custom_call.1} parent=1 // loop_pre_header
      _
    $region3: #{tpu_custom_call.1} parent=1 // loop_header
      %s13 = sphi 0, %s17
      %p14 = scmp.ge.s32.totalorder %s13, 4
      %s23 = sphi 0, %s25
      %s26 = sphi 0, %s23
      %s27 = sphi 0, %s26
      %s43 = sphi 0, %s27
      %s49 = sphi 0, %s51
      %s52 = sphi 0, %s49
      %s53 = sphi 0, %s52
      %s69 = sphi 0, %s53
      %s73 = sphi 0, %s73
      %s75 = sphi 0, %s73
      %s76 = sphi 0, %s75
      %s90 = sphi 0, %s76
      %s94 = sphi 0, %s94
      %s96 = sphi 0, %s94
      %s97 = sphi 0, %s96
      %s111 = sphi 0, %s97
      %s117 = sphi 0, %s119
      %s120 = sphi 0, %s117
      %s121 = sphi 0, %s120
      %s137 = sphi 0, %s121
    $region4: #{tpu_custom_call.1} parent=1 // loop_header_branch
      %16 = sbr.rel (%p14) target = $region8
    $region5: #{tpu_custom_call.1} parent=1 // loop_body
      %s18 = ssub.s32 %s13, 1
      %s19 = ssub.s32 %s13, 2
      %s20 = sadd.s32 %s13, 1
      %s21 = ssub.s32 %s13, %s20
      %p22 = scmp.eq.s32.totalorder %s21, 0
      %s24 = sadd.s32 %s23, 1
      %s25 = scalar_select %p22, %s23, %s24
      %p28 = pneg %p22
      %p29 = scmp.eq.s32.totalorder %s13, 1
      %p30 = por %p28, %p29
      %p31 = scmp.ne.s32.totalorder %s23, %s26
      %p32 = scmp.eq.s32.totalorder %s13, 0
      %p33 = por %p31, %p32
      %p34 = scmp.ne.s32.totalorder %s23, %s26
      %p35 = scmp.eq.s32.totalorder %s18, 1
      %p36 = por %p34, %p35
      %p37 = scmp.ne.s32.totalorder %s26, %s27
      %p38 = scmp.eq.s32.totalorder %s18, 0
      %p39 = por %p37, %p38
      %p40 = scmp.ne.s32.totalorder %s26, %s27
      %p41 = scmp.eq.s32.totalorder %s19, 1
      %p42 = por %p40, %p41
      %p44 = scmp.ne.s32.totalorder %s27, %s43
      %p45 = scmp.eq.s32.totalorder %s19, 0
      %p46 = por %p44, %p45
      %s47 = ssub.s32 %s13, %s20
      %p48 = scmp.eq.s32.totalorder %s47, 0
      %s50 = sadd.s32 %s49, 1
      %s51 = scalar_select %p48, %s49, %s50
      %p54 = pneg %p48
      %p55 = scmp.eq.s32.totalorder %s13, 1
      %p56 = por %p54, %p55
      %p57 = scmp.ne.s32.totalorder %s49, %s52
      %p58 = scmp.eq.s32.totalorder %s13, 0
      %p59 = por %p57, %p58
      %p60 = scmp.ne.s32.totalorder %s49, %s52
      %p61 = scmp.eq.s32.totalorder %s18, 1
      %p62 = por %p60, %p61
      %p63 = scmp.ne.s32.totalorder %s52, %s53
      %p64 = scmp.eq.s32.totalorder %s18, 0
      %p65 = por %p63, %p64
      %p66 = scmp.ne.s32.totalorder %s52, %s53
      %p67 = scmp.eq.s32.totalorder %s19, 1
      %p68 = por %p66, %p67
      %p70 = scmp.ne.s32.totalorder %s53, %s69
      %p71 = scmp.eq.s32.totalorder %s19, 0
      %p72 = por %p70, %p71
      %s74 = sadd.s32 %s73, 1
      %p77 = scmp.eq.s32.totalorder %s13, 1
      %p78 = scmp.ne.s32.totalorder %s73, %s75
      %p79 = scmp.eq.s32.totalorder %s13, 0
      %p80 = por %p78, %p79
      %p81 = scmp.ne.s32.totalorder %s73, %s75
      %p82 = scmp.eq.s32.totalorder %s18, 1
      %p83 = por %p81, %p82
      %p84 = scmp.ne.s32.totalorder %s75, %s76
      %p85 = scmp.eq.s32.totalorder %s18, 0
      %p86 = por %p84, %p85
      %p87 = scmp.ne.s32.totalorder %s75, %s76
      %p88 = scmp.eq.s32.totalorder %s19, 1
      %p89 = por %p87, %p88
      %p91 = scmp.ne.s32.totalorder %s76, %s90
      %p92 = scmp.eq.s32.totalorder %s19, 0
      %p93 = por %p91, %p92
      %s95 = sadd.s32 %s94, 1
      %p98 = scmp.eq.s32.totalorder %s13, 1
      %p99 = scmp.ne.s32.totalorder %s94, %s96
      %p100 = scmp.eq.s32.totalorder %s13, 0
      %p101 = por %p99, %p100
      %p102 = scmp.ne.s32.totalorder %s94, %s96
      %p103 = scmp.eq.s32.totalorder %s18, 1
      %p104 = por %p102, %p103
      %p105 = scmp.ne.s32.totalorder %s96, %s97
      %p106 = scmp.eq.s32.totalorder %s18, 0
      %p107 = por %p105, %p106
      %p108 = scmp.ne.s32.totalorder %s96, %s97
      %p109 = scmp.eq.s32.totalorder %s19, 1
      %p110 = por %p108, %p109
      %p112 = scmp.ne.s32.totalorder %s97, %s111
      %p113 = scmp.eq.s32.totalorder %s19, 0
      %p114 = por %p112, %p113
      %s115 = ssub.s32 %s13, %s20
      %p116 = scmp.eq.s32.totalorder %s115, 0
      %s118 = sadd.s32 %s117, 1
      %s119 = scalar_select %p116, %s117, %s118
      %p122 = pneg %p116
      %p123 = scmp.eq.s32.totalorder %s13, 1
      %p124 = por %p122, %p123
      %p125 = scmp.ne.s32.totalorder %s117, %s120
      %p126 = scmp.eq.s32.totalorder %s13, 0
      %p127 = por %p125, %p126
      %p128 = scmp.ne.s32.totalorder %s117, %s120
      %p129 = scmp.eq.s32.totalorder %s18, 1
      %p130 = por %p128, %p129
      %p131 = scmp.ne.s32.totalorder %s120, %s121
      %p132 = scmp.eq.s32.totalorder %s18, 0
      %p133 = por %p131, %p132
      %p134 = scmp.ne.s32.totalorder %s120, %s121
      %p135 = scmp.eq.s32.totalorder %s19, 1
      %p136 = por %p134, %p135
      %p138 = scmp.ne.s32.totalorder %s121, %s137
      %p139 = scmp.eq.s32.totalorder %s19, 0
      %p140 = por %p138, %p139
      %p141 = scmp.le.s32.totalorder 1, %s13
      %p142 = scmp.lt.s32.totalorder %s13, 3
      %p143 = pnand %p141, %p142
      %p144 = pneg %p143
      // Predicated region
      $region9: #{tpu_custom_call.1} parent=5 // pred_check
        _
      $region10: #{tpu_custom_call.1} parent=5 // pred_check_branch
        %146 = sbr.rel (%p143) target = $region12
      $region11: #{tpu_custom_call.1} parent=5 // pred_region
        %s147 = ssub.s32 %s13, 1
        // Predicated region
        $region13: #{tpu_custom_call.1} parent=11 // pred_check
          %p148 = pneg %p86
        $region14: #{tpu_custom_call.1} parent=11 // pred_check_branch
          %150 = sbr.rel (%p148) target = $region16
        $region15: #{tpu_custom_call.1} parent=11 // pred_region
          _
        $region16: #{tpu_custom_call.1} parent=11 // pred_fallthru
          _
        // Predicated region
        $region17: #{tpu_custom_call.1} parent=11 // pred_check
          %p151 = pneg %p107
        $region18: #{tpu_custom_call.1} parent=11 // pred_check_branch
          %153 = sbr.rel (%p151) target = $region20
        $region19: #{tpu_custom_call.1} parent=11 // pred_region
          _
        $region20: #{tpu_custom_call.1} parent=11 // pred_fallthru
          _
      $region12: #{tpu_custom_call.1} parent=5 // pred_fallthru
        _
      %p154 = scmp.lt.s32.totalorder %s13, 2
      // Predicated region
      $region21: #{tpu_custom_call.1} parent=5 // pred_check
        %p155 = pneg %p154
      $region22: #{tpu_custom_call.1} parent=5 // pred_check_branch
        %157 = sbr.rel (%p155) target = $region24
      $region23: #{tpu_custom_call.1} parent=5 // pred_region
        // Predicated region
        $region25: #{tpu_custom_call.1} parent=23 // pred_check
          %p158 = pneg %p33
        $region26: #{tpu_custom_call.1} parent=23 // pred_check_branch
          %160 = sbr.rel (%p158) target = $region28
        $region27: #{tpu_custom_call.1} parent=23 // pred_region
          %s161 = smul.u32 14, %s13
          %s162 = ssub.s32 25, %s161
          %p163 = scmp.lt.s32.totalorder %s162, 14
          %s164 = scalar_select %p163, %s162, 14
          %s165 = smul.u32 128, %s164
          %p166 = scmp.lt.s32.totalorder %s161, 24
          %s167 = scalar_select %p166, %s161, 24
          %s168 = smul.addr %s167, 8
          %s169 = scalar_lea.vmem %s0, %s168
          %s170 = smul.u32 14, %s13
          %s171 = ssub.s32 25, %s170
          %p172 = scmp.lt.s32.totalorder %s171, 14
          %s173 = scalar_select %p172, %s171, 14
          %s174 = smul.u32 128, %s173
        $region28: #{tpu_custom_call.1} parent=23 // pred_fallthru
          _
        // Predicated region
        $region29: #{tpu_custom_call.1} parent=23 // pred_check
          %p175 = pneg %p59
        $region30: #{tpu_custom_call.1} parent=23 // pred_check_branch
          %177 = sbr.rel (%p175) target = $region32
        $region31: #{tpu_custom_call.1} parent=23 // pred_region
          %s178 = smul.u32 14, %s13
          %s179 = ssub.s32 25, %s178
          %p180 = scmp.lt.s32.totalorder %s179, 14
          %s181 = scalar_select %p180, %s179, 14
          %s182 = smul.u32 64, %s181
          %p183 = scmp.lt.s32.totalorder %s178, 24
          %s184 = scalar_select %p183, %s178, 24
          %s185 = smul.addr %s184, 4
          %s186 = scalar_lea.vmem %s1, %s185
          %s187 = smul.u32 14, %s13
          %s188 = ssub.s32 25, %s187
          %p189 = scmp.lt.s32.totalorder %s188, 14
          %s190 = scalar_select %p189, %s188, 14
          %s191 = smul.u32 64, %s190
        $region32: #{tpu_custom_call.1} parent=23 // pred_fallthru
          _
      $region24: #{tpu_custom_call.1} parent=5 // pred_fallthru
        _
      %p192 = scmp.le.s32.totalorder 1, %s13
      %p193 = scmp.lt.s32.totalorder %s13, 3
      %p194 = pnand %p192, %p193
      %p195 = pneg %p194
      // Predicated region
      $region33: #{tpu_custom_call.1} parent=5 // pred_check
        _
      $region34: #{tpu_custom_call.1} parent=5 // pred_check_branch
        %197 = sbr.rel (%p194) target = $region36
      $region35: #{tpu_custom_call.1} parent=5 // pred_region
        %s198 = ssub.s32 %s13, 1
        %s199 = smul.u32 14, %s18
        %s200 = ssub.s32 25, %s199
        %p201 = scmp.lt.s32.totalorder %s200, 14
        %s202 = scalar_select %p201, %s200, 14
        %s203 = smul.u32 128, %s202
        %p204 = scmp.lt.s32.totalorder %s199, 24
        %s205 = scalar_select %p204, %s199, 24
        %s206 = smul.addr %s205, 8
        %s207 = scalar_lea.vmem %s0, %s206
        %p208 = pneg %p39
        %p209 = pneg %p36
        %s210 = smul.u32 14, %s18
        %s211 = ssub.s32 25, %s210
        %p212 = scmp.lt.s32.totalorder %s211, 14
        %s213 = scalar_select %p212, %s211, 14
        %s214 = smul.u32 64, %s213
        %p215 = scmp.lt.s32.totalorder %s210, 24
        %s216 = scalar_select %p215, %s210, 24
        %s217 = smul.addr %s216, 4
        %s218 = scalar_lea.vmem %s1, %s217
        %p219 = pneg %p65
        %p220 = pneg %p62
        %p221 = pneg %p86
        %p222 = pneg %p83
        %p223 = pneg %p107
        %p224 = pneg %p104
        %p225 = pneg %p133
        %p226 = pneg %p130
        %s227 = sand.u32 %s120, 1
        %s228 = scalar_lea.sflag [#allocation3], %s227
        %s229 = sand.u32 %s120, 1
        %s230 = smul.addr %s229, 56
        %s231 = scalar_lea.vmem [#allocation2], %s230
        %s232 = smul.u32 14, %s18
        %s233 = ssub.s32 25, %s232
        %p234 = scmp.lt.s32.totalorder %s233, 14
        %s235 = scalar_select %p234, %s233, 14
        %s236 = smul.u32 128, %s235
        %p237 = scmp.lt.s32.totalorder %s232, 24
        %s238 = scalar_select %p237, %s232, 24
        %s239 = smul.addr %s238, 8
        %s240 = scalar_lea.vmem %s0, %s239
        %s241 = smul.u32 14, %s18
        %s242 = ssub.s32 25, %s241
        %p243 = scmp.lt.s32.totalorder %s242, 14
        %s244 = scalar_select %p243, %s242, 14
        %s245 = smul.u32 128, %s244
        %s246 = smul.u32 14, %s18
        %s247 = ssub.s32 25, %s246
        %p248 = scmp.lt.s32.totalorder %s247, 14
        %s249 = scalar_select %p248, %s247, 14
        %s250 = smul.u32 64, %s249
        %p251 = scmp.lt.s32.totalorder %s246, 24
        %s252 = scalar_select %p251, %s246, 24
        %s253 = smul.addr %s252, 4
        %s254 = scalar_lea.vmem %s1, %s253
        %s255 = smul.u32 14, %s18
        %s256 = ssub.s32 25, %s255
        %p257 = scmp.lt.s32.totalorder %s256, 14
        %s258 = scalar_select %p257, %s256, 14
        %s259 = smul.u32 64, %s258
        %s260 = smul.u32 14, %s18
        %s261 = ssub.s32 25, %s260
        %p262 = scmp.lt.s32.totalorder %s261, 14
        %s263 = scalar_select %p262, %s261, 14
        %s264 = smul.u32 64, %s263
        %v266 = vld [vmem:[%s240] sm:$0xff]
        %v267 = vld [vmem:[%s240 + $0x8] sm:$0xff]
        %v268 = vld [vmem:[%s240 + $0x10] sm:$0xff]
        %v269 = vld [vmem:[%s240 + $0x18] sm:$0xff]
        %v270 = vld [vmem:[%s240 + $0x20] sm:$0xff]
        %v271 = vld [vmem:[%s240 + $0x28] sm:$0xff]
        %v272 = vld [vmem:[%s240 + $0x30] sm:$0xff]
        %v273 = vld [vmem:[%s240 + $0x38] sm:$0xff]
        %v274 = vld [vmem:[%s240 + $0x40] sm:$0xff]
        %v275 = vld [vmem:[%s240 + $0x48] sm:$0xff]
        %v276 = vld [vmem:[%s240 + $0x50] sm:$0xff]
        %v277 = vld [vmem:[%s240 + $0x58] sm:$0xff]
        %v278 = vld [vmem:[%s240 + $0x60] sm:$0xff]
        %v279 = vld [vmem:[%s240 + $0x68] sm:$0xff]
        %v280 = vadd.s32 %v266, 64
        %v281 = vadd.s32 %v267, 64
        %v282 = vadd.s32 %v268, 64
        %v283 = vadd.s32 %v269, 64
        %v284 = vadd.s32 %v270, 64
        %v285 = vadd.s32 %v271, 64
        %v286 = vadd.s32 %v272, 64
        %v287 = vadd.s32 %v273, 64
        %v288 = vadd.s32 %v274, 64
        %v289 = vadd.s32 %v275, 64
        %v290 = vadd.s32 %v276, 64
        %v291 = vadd.s32 %v277, 64
        %v292 = vadd.s32 %v278, 64
        %v293 = vadd.s32 %v279, 64
        %v294 = vlaneseq
        %v295 = vand.u32 %v294, 127
        %296 = vset.pattern.permute.xlu0 0
        %297 = vperm.xlu0 %296, %v266
        %v298 = vpop.permute.xlu0 %297
        %299 = vset.pattern.permute.xlu0 0
        %300 = vperm.xlu0 %299, %v267
        %v301 = vpop.permute.xlu0 %300
        %302 = vset.pattern.permute.xlu0 0
        %303 = vperm.xlu0 %302, %v268
        %v304 = vpop.permute.xlu0 %303
        %305 = vset.pattern.permute.xlu0 0
        %306 = vperm.xlu0 %305, %v269
        %v307 = vpop.permute.xlu0 %306
        %308 = vset.pattern.permute.xlu0 0
        %309 = vperm.xlu0 %308, %v270
        %v310 = vpop.permute.xlu0 %309
        %311 = vset.pattern.permute.xlu0 0
        %312 = vperm.xlu0 %311, %v271
        %v313 = vpop.permute.xlu0 %312
        %314 = vset.pattern.permute.xlu0 0
        %315 = vperm.xlu0 %314, %v272
        %v316 = vpop.permute.xlu0 %315
        %317 = vset.pattern.permute.xlu0 0
        %318 = vperm.xlu0 %317, %v273
        %v319 = vpop.permute.xlu0 %318
        %320 = vset.pattern.permute.xlu0 0
        %321 = vperm.xlu0 %320, %v274
        %v322 = vpop.permute.xlu0 %321
        %323 = vset.pattern.permute.xlu0 0
        %324 = vperm.xlu0 %323, %v275
        %v325 = vpop.permute.xlu0 %324
        %326 = vset.pattern.permute.xlu0 0
        %327 = vperm.xlu0 %326, %v276
        %v328 = vpop.permute.xlu0 %327
        %329 = vset.pattern.permute.xlu0 0
        %330 = vperm.xlu0 %329, %v277
        %v331 = vpop.permute.xlu0 %330
        %332 = vset.pattern.permute.xlu0 0
        %333 = vperm.xlu0 %332, %v278
        %v334 = vpop.permute.xlu0 %333
        %335 = vset.pattern.permute.xlu0 0
        %336 = vperm.xlu0 %335, %v279
        %v337 = vpop.permute.xlu0 %336
        %vm338 = vcmp.eq.s32.totalorder %v295, %v298
        %vm339 = vcmp.eq.s32.totalorder %v295, %v301
        %vm340 = vcmp.eq.s32.totalorder %v295, %v304
        %vm341 = vcmp.eq.s32.totalorder %v295, %v307
        %vm342 = vcmp.eq.s32.totalorder %v295, %v310
        %vm343 = vcmp.eq.s32.totalorder %v295, %v313
        %vm344 = vcmp.eq.s32.totalorder %v295, %v316
        %vm345 = vcmp.eq.s32.totalorder %v295, %v319
        %vm346 = vcmp.eq.s32.totalorder %v295, %v322
        %vm347 = vcmp.eq.s32.totalorder %v295, %v325
        %vm348 = vcmp.eq.s32.totalorder %v295, %v328
        %vm349 = vcmp.eq.s32.totalorder %v295, %v331
        %vm350 = vcmp.eq.s32.totalorder %v295, %v334
        %vm351 = vcmp.eq.s32.totalorder %v295, %v337
        %352 = vset.pattern.permute.xlu0 1
        %353 = vperm.xlu0 %352, %v280
        %v354 = vpop.permute.xlu0 %353
        %355 = vset.pattern.permute.xlu0 1
        %356 = vperm.xlu0 %355, %v281
        %v357 = vpop.permute.xlu0 %356
        %358 = vset.pattern.permute.xlu0 1
        %359 = vperm.xlu0 %358, %v282
        %v360 = vpop.permute.xlu0 %359
        %361 = vset.pattern.permute.xlu0 1
        %362 = vperm.xlu0 %361, %v283
        %v363 = vpop.permute.xlu0 %362
        %364 = vset.pattern.permute.xlu0 1
        %365 = vperm.xlu0 %364, %v284
        %v366 = vpop.permute.xlu0 %365
        %367 = vset.pattern.permute.xlu0 1
        %368 = vperm.xlu0 %367, %v285
        %v369 = vpop.permute.xlu0 %368
        %370 = vset.pattern.permute.xlu0 1
        %371 = vperm.xlu0 %370, %v286
        %v372 = vpop.permute.xlu0 %371
        %373 = vset.pattern.permute.xlu0 1
        %374 = vperm.xlu0 %373, %v287
        %v375 = vpop.permute.xlu0 %374
        %376 = vset.pattern.permute.xlu0 1
        %377 = vperm.xlu0 %376, %v288
        %v378 = vpop.permute.xlu0 %377
        %379 = vset.pattern.permute.xlu0 1
        %380 = vperm.xlu0 %379, %v289
        %v381 = vpop.permute.xlu0 %380
        %382 = vset.pattern.permute.xlu0 1
        %383 = vperm.xlu0 %382, %v290
        %v384 = vpop.permute.xlu0 %383
        %385 = vset.pattern.permute.xlu0 1
        %386 = vperm.xlu0 %385, %v291
        %v387 = vpop.permute.xlu0 %386
        %388 = vset.pattern.permute.xlu0 1
        %389 = vperm.xlu0 %388, %v292
        %v390 = vpop.permute.xlu0 %389
        %391 = vset.pattern.permute.xlu0 1
        %392 = vperm.xlu0 %391, %v293
        %v393 = vpop.permute.xlu0 %392
        %vm394 = vcmp.eq.s32.totalorder %v295, %v354
        %vm395 = vcmp.eq.s32.totalorder %v295, %v357
        %vm396 = vcmp.eq.s32.totalorder %v295, %v360
        %vm397 = vcmp.eq.s32.totalorder %v295, %v363
        %vm398 = vcmp.eq.s32.totalorder %v295, %v366
        %vm399 = vcmp.eq.s32.totalorder %v295, %v369
        %vm400 = vcmp.eq.s32.totalorder %v295, %v372
        %vm401 = vcmp.eq.s32.totalorder %v295, %v375
        %vm402 = vcmp.eq.s32.totalorder %v295, %v378
        %vm403 = vcmp.eq.s32.totalorder %v295, %v381
        %vm404 = vcmp.eq.s32.totalorder %v295, %v384
        %vm405 = vcmp.eq.s32.totalorder %v295, %v387
        %vm406 = vcmp.eq.s32.totalorder %v295, %v390
        %vm407 = vcmp.eq.s32.totalorder %v295, %v393
        %vm408 = vmor %vm338, %vm394
        %vm409 = vmor %vm339, %vm395
        %vm410 = vmor %vm340, %vm396
        %vm411 = vmor %vm341, %vm397
        %vm412 = vmor %vm342, %vm398
        %vm413 = vmor %vm343, %vm399
        %vm414 = vmor %vm344, %vm400
        %vm415 = vmor %vm345, %vm401
        %vm416 = vmor %vm346, %vm402
        %vm417 = vmor %vm347, %vm403
        %vm418 = vmor %vm348, %vm404
        %vm419 = vmor %vm349, %vm405
        %vm420 = vmor %vm350, %vm406
        %vm421 = vmor %vm351, %vm407
        %v422 = vsel %vm408, 1, 0
        %v423 = vsel %vm409, 1, 0
        %v424 = vsel %vm410, 1, 0
        %v425 = vsel %vm411, 1, 0
        %v426 = vsel %vm412, 1, 0
        %v427 = vsel %vm413, 1, 0
        %v428 = vsel %vm414, 1, 0
        %v429 = vsel %vm415, 1, 0
        %v430 = vsel %vm416, 1, 0
        %v431 = vsel %vm417, 1, 0
        %v432 = vsel %vm418, 1, 0
        %v433 = vsel %vm419, 1, 0
        %v434 = vsel %vm420, 1, 0
        %v435 = vsel %vm421, 1, 0
        %v436 = vcvt.s32.f32 %v422
        %v437 = vcvt.s32.f32 %v423
        %v438 = vcvt.s32.f32 %v424
        %v439 = vcvt.s32.f32 %v425
        %v440 = vcvt.s32.f32 %v426
        %v441 = vcvt.s32.f32 %v427
        %v442 = vcvt.s32.f32 %v428
        %v443 = vcvt.s32.f32 %v429
        %v444 = vcvt.s32.f32 %v430
        %v445 = vcvt.s32.f32 %v431
        %v446 = vcvt.s32.f32 %v432
        %v447 = vcvt.s32.f32 %v433
        %v448 = vcvt.s32.f32 %v434
        %v449 = vcvt.s32.f32 %v435
        %v450 = vpack.c.bf16 %v437, %v436
        %v451 = vpack.c.bf16 %v439, %v438
        %v452 = vpack.c.bf16 %v441, %v440
        %v453 = vpack.c.bf16 %v443, %v442
        %v454 = vpack.c.bf16 %v445, %v444
        %v455 = vpack.c.bf16 %v447, %v446
        %v456 = vpack.c.bf16 %v449, %v448
        %v457 = vld [vmem:[%s2] sm:$0xf]
        %v458 = vld [vmem:[%s2 + $0x4] sm:$0xf]
        %v459 = vld [vmem:[%s2 + $0x8] sm:$0xf]
        %v460 = vld [vmem:[%s2 + $0xc] sm:$0xf]
        %v461 = vld [vmem:[%s2 + $0x10] sm:$0xf]
        %v462 = vld [vmem:[%s2 + $0x14] sm:$0xf]
        %v463 = vld [vmem:[%s2 + $0x18] sm:$0xf]
        %v464 = vld [vmem:[%s2 + $0x1c] sm:$0xf]
        %v465 = vld [vmem:[%s2 + $0x20] sm:$0xf]
        %v466 = vld [vmem:[%s2 + $0x24] sm:$0xf]
        %v467 = vld [vmem:[%s2 + $0x28] sm:$0xf]
        %v468 = vld [vmem:[%s2 + $0x2c] sm:$0xf]
        %v469 = vld [vmem:[%s2 + $0x30] sm:$0xf]
        %v470 = vld [vmem:[%s2 + $0x34] sm:$0xf]
        %v471 = vld [vmem:[%s2 + $0x38] sm:$0xf]
        %v472 = vld [vmem:[%s2 + $0x3c] sm:$0xf]
        %v473 = vld [vmem:[%s254] sm:$0xf]
        %v474 = vld [vmem:[%s254 + $0x4] sm:$0xf]
        %v475 = vld [vmem:[%s254 + $0x8] sm:$0xf]
        %v476 = vld [vmem:[%s254 + $0xc] sm:$0xf]
        %v477 = vld [vmem:[%s254 + $0x10] sm:$0xf]
        %v478 = vld [vmem:[%s254 + $0x14] sm:$0xf]
        %v479 = vld [vmem:[%s254 + $0x18] sm:$0xf]
        %v480 = vld [vmem:[%s254 + $0x1c] sm:$0xf]
        %v481 = vld [vmem:[%s254 + $0x20] sm:$0xf]
        %v482 = vld [vmem:[%s254 + $0x24] sm:$0xf]
        %v483 = vld [vmem:[%s254 + $0x28] sm:$0xf]
        %v484 = vld [vmem:[%s254 + $0x2c] sm:$0xf]
        %v485 = vld [vmem:[%s254 + $0x30] sm:$0xf]
        %v486 = vld [vmem:[%s254 + $0x34] sm:$0xf]
        %v487 = vunpack.c.l.bf16 %v473
        %v488 = vunpack.c.l.bf16 %v474
        %v489 = vunpack.c.l.bf16 %v475
        %v490 = vunpack.c.l.bf16 %v476
        %v491 = vunpack.c.l.bf16 %v477
        %v492 = vunpack.c.l.bf16 %v478
        %v493 = vunpack.c.l.bf16 %v479
        %v494 = vunpack.c.l.bf16 %v480
        %v495 = vunpack.c.l.bf16 %v481
        %v496 = vunpack.c.l.bf16 %v482
        %v497 = vunpack.c.l.bf16 %v483
        %v498 = vunpack.c.l.bf16 %v484
        %v499 = vunpack.c.l.bf16 %v485
        %v500 = vunpack.c.l.bf16 %v486
        %v501 = vld [vmem:[%s3] sm:$0x1]
        %503 = vset.pattern.permute.xlu0 0
        %504 = vperm.xlu0 %503, %v487
        %v505 = vpop.permute.xlu0 %504
        %508 = vset.pattern.permute.xlu0 0
        %509 = vperm.xlu0 %508, %v488
        %v510 = vpop.permute.xlu0 %509
        %513 = vset.pattern.permute.xlu0 0
        %514 = vperm.xlu0 %513, %v489
        %v515 = vpop.permute.xlu0 %514
        %518 = vset.pattern.permute.xlu0 0
        %519 = vperm.xlu0 %518, %v490
        %v520 = vpop.permute.xlu0 %519
        %523 = vset.pattern.permute.xlu0 0
        %524 = vperm.xlu0 %523, %v491
        %v525 = vpop.permute.xlu0 %524
        %528 = vset.pattern.permute.xlu0 0
        %529 = vperm.xlu0 %528, %v492
        %v530 = vpop.permute.xlu0 %529
        %533 = vset.pattern.permute.xlu0 0
        %534 = vperm.xlu0 %533, %v493
        %v535 = vpop.permute.xlu0 %534
        %538 = vset.pattern.permute.xlu0 0
        %539 = vperm.xlu0 %538, %v494
        %v540 = vpop.permute.xlu0 %539
        %543 = vset.pattern.permute.xlu0 0
        %544 = vperm.xlu0 %543, %v495
        %v545 = vpop.permute.xlu0 %544
        %548 = vset.pattern.permute.xlu0 0
        %549 = vperm.xlu0 %548, %v496
        %v550 = vpop.permute.xlu0 %549
        %553 = vset.pattern.permute.xlu0 0
        %554 = vperm.xlu0 %553, %v497
        %v555 = vpop.permute.xlu0 %554
        %558 = vset.pattern.permute.xlu0 0
        %559 = vperm.xlu0 %558, %v498
        %v560 = vpop.permute.xlu0 %559
        %563 = vset.pattern.permute.xlu0 0
        %564 = vperm.xlu0 %563, %v499
        %v565 = vpop.permute.xlu0 %564
        %568 = vset.pattern.permute.xlu0 0
        %569 = vperm.xlu0 %568, %v500
        %v570 = vpop.permute.xlu0 %569
        %v573 = vlaneseq
        %v574 = vshrl.u32 %v573, 7
        %v575 = vsub.s32 0, %v574
        %v576 = vrot.slane %v501, %v575
        %v578 = vmul.f32 %v505, %v576
        %v579 = vmul.f32 %v510, %v576
        %v580 = vmul.f32 %v515, %v576
        %v581 = vmul.f32 %v520, %v576
        %v582 = vmul.f32 %v525, %v576
        %v583 = vmul.f32 %v530, %v576
        %v584 = vmul.f32 %v535, %v576
        %v585 = vmul.f32 %v540, %v576
        %v586 = vmul.f32 %v545, %v576
        %v587 = vmul.f32 %v550, %v576
        %v588 = vmul.f32 %v555, %v576
        %v589 = vmul.f32 %v560, %v576
        %v590 = vmul.f32 %v565, %v576
        %v591 = vmul.f32 %v570, %v576
        %v608 = vunpack.c.l.b16 %v457
        %v609 = vunpack.c.l.b16 %v458
        %v610 = vunpack.c.l.b16 %v459
        %v611 = vunpack.c.l.b16 %v460
        %v612 = vunpack.c.l.b16 %v461
        %v613 = vunpack.c.l.b16 %v462
        %v614 = vunpack.c.l.b16 %v463
        %v615 = vunpack.c.l.b16 %v464
        %v616 = vunpack.c.l.b16 %v465
        %v617 = vunpack.c.l.b16 %v466
        %v618 = vunpack.c.l.b16 %v467
        %v619 = vunpack.c.l.b16 %v468
        %v620 = vunpack.c.l.b16 %v469
        %v621 = vunpack.c.l.b16 %v470
        %v622 = vunpack.c.l.b16 %v471
        %v623 = vunpack.c.l.b16 %v472
        %v624 = vpack.c.b16 %v609, %v608
        %v625 = vpack.c.b16 %v611, %v610
        %v626 = vpack.c.b16 %v613, %v612
        %v627 = vpack.c.b16 %v615, %v614
        %v628 = vpack.c.b16 %v617, %v616
        %v629 = vpack.c.b16 %v619, %v618
        %v630 = vpack.c.b16 %v621, %v620
        %v631 = vpack.c.b16 %v623, %v622
        %640 = vmatprep.subr.bf16.mxu0 0
        %641 = vmatpush1.bf16.msra.mxu0 %v624
        %642 = vmatprep.subr.bf16.mxu0 0
        %643 = vmatpush1.bf16.msra.mxu0 %v625
        %644 = vmatprep.subr.bf16.mxu0 0
        %645 = vmatpush1.bf16.msra.mxu0 %v626
        %646 = vmatprep.subr.bf16.mxu0 0
        %647 = vmatpush1.bf16.msra.mxu0 %v627
        %648 = vmatprep.subr.bf16.mxu0 0
        %649 = vmatpush1.bf16.msra.mxu0 %v628
        %650 = vmatprep.subr.bf16.mxu0 0
        %651 = vmatpush1.bf16.msra.mxu0 %v629
        %652 = vmatprep.subr.bf16.mxu0 0
        %653 = vmatpush1.bf16.msra.mxu0 %v630
        %654 = vmatprep.subr.bf16.mxu0 0
        %655 = vmatpush1.bf16.msra.mxu0 %v631
        %656 = vmatprep.subr.bf16.mxu0 0
        %657 = vmatpush1.bf16.msra.mxu0 0
        %658 = vmatprep.subr.bf16.mxu0 0
        %659 = vmatpush1.bf16.msra.mxu0 0
        %660 = vmatprep.subr.bf16.mxu0 0
        %661 = vmatpush1.bf16.msra.mxu0 0
        %662 = vmatprep.subr.bf16.mxu0 0
        %663 = vmatpush1.bf16.msra.mxu0 0
        %664 = vmatprep.subr.bf16.mxu0 0
        %665 = vmatpush1.bf16.msra.mxu0 0
        %666 = vmatprep.subr.bf16.mxu0 0
        %667 = vmatpush1.bf16.msra.mxu0 0
        %668 = vmatprep.subr.bf16.mxu0 0
        %669 = vmatpush1.bf16.msra.mxu0 0
        %670 = vmatprep.subr.bf16.mxu0 0
        %671 = vmatpush1.bf16.msra.mxu0 0
        %672 = vmatprep.mubr.bf16.mxu0 0
        %673 = vmatmul.mubr.bf16.gmra.mrb[0].mxu0 %v450
        %v674 = vpop.f32.mrb[0].mxu0
        %v675 = vadd.f32 %v578, %v674
        %v676 = vpop.f32.mrb[0].mxu0
        %v677 = vpop.f32.mrb[0].mxu0
        %v678 = vadd.f32 %v579, %v677
        %v679 = vpop.f32.mrb[0].mxu0
        %680 = vmatprep.mubr.bf16.mxu0 0
        %681 = vmatmul.mubr.bf16.gmra.mrb[0].mxu0 %v451
        %v682 = vpop.f32.mrb[0].mxu0
        %v683 = vadd.f32 %v580, %v682
        %v684 = vpop.f32.mrb[0].mxu0
        %v685 = vpop.f32.mrb[0].mxu0
        %v686 = vadd.f32 %v581, %v685
        %v687 = vpop.f32.mrb[0].mxu0
        %688 = vmatprep.mubr.bf16.mxu0 0
        %689 = vmatmul.mubr.bf16.gmra.mrb[0].mxu0 %v452
        %v690 = vpop.f32.mrb[0].mxu0
        %v691 = vadd.f32 %v582, %v690
        %v692 = vpop.f32.mrb[0].mxu0
        %v693 = vpop.f32.mrb[0].mxu0
        %v694 = vadd.f32 %v583, %v693
        %v695 = vpop.f32.mrb[0].mxu0
        %696 = vmatprep.mubr.bf16.mxu0 0
        %697 = vmatmul.mubr.bf16.gmra.mrb[0].mxu0 %v453
        %v698 = vpop.f32.mrb[0].mxu0
        %v699 = vadd.f32 %v584, %v698
        %v700 = vpop.f32.mrb[0].mxu0
        %v701 = vpop.f32.mrb[0].mxu0
        %v702 = vadd.f32 %v585, %v701
        %v703 = vpop.f32.mrb[0].mxu0
        %704 = vmatprep.mubr.bf16.mxu0 0
        %705 = vmatmul.mubr.bf16.gmra.mrb[0].mxu0 %v454
        %v706 = vpop.f32.mrb[0].mxu0
        %v707 = vadd.f32 %v586, %v706
        %v708 = vpop.f32.mrb[0].mxu0
        %v709 = vpop.f32.mrb[0].mxu0
        %v710 = vadd.f32 %v587, %v709
        %v711 = vpop.f32.mrb[0].mxu0
        %712 = vmatprep.mubr.bf16.mxu0 0
        %713 = vmatmul.mubr.bf16.gmra.mrb[0].mxu0 %v455
        %v714 = vpop.f32.mrb[0].mxu0
        %v715 = vadd.f32 %v588, %v714
        %v716 = vpop.f32.mrb[0].mxu0
        %v717 = vpop.f32.mrb[0].mxu0
        %v718 = vadd.f32 %v589, %v717
        %v719 = vpop.f32.mrb[0].mxu0
        %720 = vmatprep.mubr.bf16.mxu0 0
        %721 = vmatmul.mubr.bf16.gmra.mrb[0].mxu0 %v456
        %v722 = vpop.f32.mrb[0].mxu0
        %v723 = vadd.f32 %v590, %v722
        %v724 = vpop.f32.mrb[0].mxu0
        %v725 = vpop.f32.mrb[0].mxu0
        %v726 = vadd.f32 %v591, %v725
        %v727 = vpop.f32.mrb[0].mxu0
        %728 = vdwg.mxu0
        %vm729 = vcmp.gt.f32.partialorder %v675, 0.0
        %vm730 = vcmp.gt.f32.partialorder %v678, 0.0
        %vm731 = vcmp.gt.f32.partialorder %v683, 0.0
        %vm732 = vcmp.gt.f32.partialorder %v686, 0.0
        %vm733 = vcmp.gt.f32.partialorder %v691, 0.0
        %vm734 = vcmp.gt.f32.partialorder %v694, 0.0
        %vm735 = vcmp.gt.f32.partialorder %v699, 0.0
        %vm736 = vcmp.gt.f32.partialorder %v702, 0.0
        %vm737 = vcmp.gt.f32.partialorder %v707, 0.0
        %vm738 = vcmp.gt.f32.partialorder %v710, 0.0
        %vm739 = vcmp.gt.f32.partialorder %v715, 0.0
        %vm740 = vcmp.gt.f32.partialorder %v718, 0.0
        %vm741 = vcmp.gt.f32.partialorder %v723, 0.0
        %vm742 = vcmp.gt.f32.partialorder %v726, 0.0
        %v743 = vmul.f32 %v675, 0.01
        %v744 = vmul.f32 %v678, 0.01
        %v745 = vmul.f32 %v683, 0.01
        %v746 = vmul.f32 %v686, 0.01
        %v747 = vmul.f32 %v691, 0.01
        %v748 = vmul.f32 %v694, 0.01
        %v749 = vmul.f32 %v699, 0.01
        %v750 = vmul.f32 %v702, 0.01
        %v751 = vmul.f32 %v707, 0.01
        %v752 = vmul.f32 %v710, 0.01
        %v753 = vmul.f32 %v715, 0.01
        %v754 = vmul.f32 %v718, 0.01
        %v755 = vmul.f32 %v723, 0.01
        %v756 = vmul.f32 %v726, 0.01
        %v757 = vsel %vm729, %v675, %v743
        %v758 = vsel %vm730, %v678, %v744
        %v759 = vsel %vm731, %v683, %v745
        %v760 = vsel %vm732, %v686, %v746
        %v761 = vsel %vm733, %v691, %v747
        %v762 = vsel %vm734, %v694, %v748
        %v763 = vsel %vm735, %v699, %v749
        %v764 = vsel %vm736, %v702, %v750
        %v765 = vsel %vm737, %v707, %v751
        %v766 = vsel %vm738, %v710, %v752
        %v767 = vsel %vm739, %v715, %v753
        %v768 = vsel %vm740, %v718, %v754
        %v769 = vsel %vm741, %v723, %v755
        %v770 = vsel %vm742, %v726, %v756
        %v771 = vpack.c.bf16 %v758, %v757
        %v772 = vpack.c.bf16 %v760, %v759
        %v773 = vpack.c.bf16 %v762, %v761
        %v774 = vpack.c.bf16 %v764, %v763
        %v775 = vpack.c.bf16 %v766, %v765
        %v776 = vpack.c.bf16 %v768, %v767
        %v777 = vpack.c.bf16 %v770, %v769
        %v785 = vunpack.c.l.b16 %v771
        %v786 = vunpack.c.h.b16 %v771
        %v787 = vunpack.c.l.b16 %v772
        %v788 = vunpack.c.h.b16 %v772
        %v789 = vunpack.c.l.b16 %v773
        %v790 = vunpack.c.h.b16 %v773
        %v791 = vunpack.c.l.b16 %v774
        %v792 = vunpack.c.h.b16 %v774
        %v793 = vunpack.c.l.b16 %v775
        %v794 = vunpack.c.h.b16 %v775
        %v795 = vunpack.c.l.b16 %v776
        %v796 = vunpack.c.h.b16 %v776
        %v797 = vunpack.c.l.b16 %v777
        %v798 = vunpack.c.h.b16 %v777
        %v799 = vpack.c.b16 %v785, %v785
        %v800 = vpack.c.b16 %v786, %v786
        %v801 = vpack.c.b16 %v787, %v787
        %v802 = vpack.c.b16 %v788, %v788
        %v803 = vpack.c.b16 %v789, %v789
        %v804 = vpack.c.b16 %v790, %v790
        %v805 = vpack.c.b16 %v791, %v791
        %v806 = vpack.c.b16 %v792, %v792
        %v807 = vpack.c.b16 %v793, %v793
        %v808 = vpack.c.b16 %v794, %v794
        %v809 = vpack.c.b16 %v795, %v795
        %v810 = vpack.c.b16 %v796, %v796
        %v811 = vpack.c.b16 %v797, %v797
        %v812 = vpack.c.b16 %v798, %v798
        %827 = vst [vmem:[%s231] sm:$0xf] %v799
        %828 = vst [vmem:[%s231 + $0x4] sm:$0xf] %v800
        %829 = vst [vmem:[%s231 + $0x8] sm:$0xf] %v801
        %830 = vst [vmem:[%s231 + $0xc] sm:$0xf] %v802
        %831 = vst [vmem:[%s231 + $0x10] sm:$0xf] %v803
        %832 = vst [vmem:[%s231 + $0x14] sm:$0xf] %v804
        %833 = vst [vmem:[%s231 + $0x18] sm:$0xf] %v805
        %834 = vst [vmem:[%s231 + $0x1c] sm:$0xf] %v806
        %835 = vst [vmem:[%s231 + $0x20] sm:$0xf] %v807
        %836 = vst [vmem:[%s231 + $0x24] sm:$0xf] %v808
        %837 = vst [vmem:[%s231 + $0x28] sm:$0xf] %v809
        %838 = vst [vmem:[%s231 + $0x2c] sm:$0xf] %v810
        %839 = vst [vmem:[%s231 + $0x30] sm:$0xf] %v811
        %840 = vst [vmem:[%s231 + $0x34] sm:$0xf] %v812
        %s841 = sand.u32 %s120, 1
        %s842 = scalar_lea.sflag [#allocation3], %s841
        %s843 = sand.u32 %s120, 1
        %s844 = smul.addr %s843, 56
        %s845 = scalar_lea.vmem [#allocation2], %s844
        // Predicated region
        $region37: #{tpu_custom_call.1} parent=35 // pred_check
          %p846 = pneg %p130
        $region38: #{tpu_custom_call.1} parent=35 // pred_check_branch
          %848 = sbr.rel (%p846) target = $region40
        $region39: #{tpu_custom_call.1} parent=35 // pred_region
          %s849 = smul.u32 14, %s18
          %s850 = ssub.s32 25, %s849
          %p851 = scmp.lt.s32.totalorder %s850, 14
          %s852 = scalar_select %p851, %s850, 14
          %s853 = smul.u32 64, %s852
          %s855 = ssub.s32 896, %s853
          %856 = vsyncadd %s842, %s855
          %p857 = scmp.ne.s32.totalorder 0, %s853
          %s858 = smul.addr %s849, 64
          %s859 = scalar_lea.hbm %s4, %s858
          %s860 = smul.u32 4, %s852
          %s861 = sshll.u32 %s845, 4
          %s862 = int_to_ptr.vmem [resolvable:$true] %s861
          %s863 = sshll.u32 %s860, 4
          %867 = dma.vmem_to_hbm [thread:$0]  (%p857), %s862, %s863, %s859, %s842, 64, 64, 4
        $region40: #{tpu_custom_call.1} parent=35 // pred_fallthru
          _
      $region36: #{tpu_custom_call.1} parent=5 // pred_fallthru
        _
      %p868 = scmp.le.s32.totalorder 2, %s13
      // Predicated region
      $region41: #{tpu_custom_call.1} parent=5 // pred_check
        %p869 = pneg %p868
      $region42: #{tpu_custom_call.1} parent=5 // pred_check_branch
        %871 = sbr.rel (%p869) target = $region44
      $region43: #{tpu_custom_call.1} parent=5 // pred_region
        %s872 = ssub.s32 %s13, 2
        // Predicated region
        $region45: #{tpu_custom_call.1} parent=43 // pred_check
          %p873 = pneg %p136
        $region46: #{tpu_custom_call.1} parent=43 // pred_check_branch
          %875 = sbr.rel (%p873) target = $region48
        $region47: #{tpu_custom_call.1} parent=43 // pred_region
          %s876 = sand.u32 %s121, 1
          %s877 = scalar_lea.sflag [#allocation3], %s876
          %s878 = sand.u32 %s121, 1
          %s879 = smul.addr %s878, 56
          %s880 = scalar_lea.vmem [#allocation2], %s879
          %881 = dma.done %s877, 896
        $region48: #{tpu_custom_call.1} parent=43 // pred_fallthru
          _
      $region44: #{tpu_custom_call.1} parent=5 // pred_fallthru
        _
    $region6: #{tpu_custom_call.1} parent=1 // loop_footer
      %s17 = sadd.s32 1, %s13
    $region7: #{tpu_custom_call.1} parent=1 // loop_footer_branch
      %12 = sbr.rel target = $region3
    $region8: #{tpu_custom_call.1} parent=1 // loop_exit
      _
    %882 = vsyncpa [#allocation3], 1
    %s883 = scalar_lea.sflag [#allocation3], 1
    %884 = vsyncpa %s883, 1

</llo_original>
